<compile_context>
chip_gen: v6e
topology: v6e:2x2x1
jax: 0.10.0
libtpu: 0.0.40
codegen_flags: <defaults>
</compile_context>

<pallas_src>
import functools

import jax
import jax.numpy as jnp
from jax.experimental import pallas as pl
from jax.experimental.pallas import tpu as pltpu

LANE = 128
SUBLANE = 8


def _round_up(n, m):
    return ((n + m - 1) // m) * m


def _mlp_kernel(x_ref, w1_ref, w2_ref, w3_ref, b_ref, out_ref, *, hp, op, a):
    # x:(tb, d)  w1:(d, hp)  w2:(hp, hp)  w3:(hp, op)  b:(3, max(hp, op))
    # out:(tb, a)  -- slim, unpadded Q-value / embedding block.

    # Cast in-kernel (hidden under the HBM stall); x streams in its HBM dtype.
    x = x_ref[...].astype(w1_ref.dtype)

    # Layer 1: Linear + ReLU.  MXU accumulates in f32; bias/ReLU stay f32.
    h1 = jnp.dot(x, w1_ref[...], preferred_element_type=jnp.float32)
    h1 = jnp.maximum(h1 + b_ref[0:1, 0:hp], 0.0)

    # Layer 2: Linear + ReLU.
    h2 = jnp.dot(h1.astype(w2_ref.dtype), w2_ref[...],
                 preferred_element_type=jnp.float32)
    h2 = jnp.maximum(h2 + b_ref[1:2, 0:hp], 0.0)

    # Layer 3: Linear.  Matmul stays lane-dense (op=128); only the first `a`
    # lanes (the real actions) are stored — padding columns are zero / inert.
    q = jnp.dot(h2.astype(w3_ref.dtype), w3_ref[...],
                preferred_element_type=jnp.float32)
    q = q + b_ref[2:3, 0:op]
    out_ref[...] = q[:, 0:a].astype(out_ref.dtype)


def pack_params(params, compute_dtype=jnp.float32):
    """Pad hidden/action dims to lane multiples and pack biases. Call once."""
    w1, b1 = params["w1"], params["b1"]
    w2, b2 = params["w2"], params["b2"]
    w3, b3 = params["w3"], params["b3"]
    d, h = w1.shape
    a = w3.shape[1]
    hp = _round_up(h, LANE)        # hidden features -> lane multiple (128)
    op = _round_up(a, LANE)        # action features -> lane multiple (128), matmul only
    bp = max(hp, op)

    def pad2(w, rows, cols):
        return jnp.pad(w, ((0, rows - w.shape[0]), (0, cols - w.shape[1])))

    bias = jnp.zeros((3, bp), jnp.float32)
    bias = bias.at[0, :h].set(b1.reshape(-1))
    bias = bias.at[1, :h].set(b2.reshape(-1))
    bias = bias.at[2, :a].set(b3.reshape(-1))

    return {
        "w1": pad2(w1, d, hp).astype(compute_dtype),   # input dim left unpadded
        "w2": pad2(w2, hp, hp).astype(compute_dtype),
        "w3": pad2(w3, hp, op).astype(compute_dtype),
        "bias": bias,                      # biases stay f32 (post-matmul adds)
        "dims": (d, a, hp, op, bp),        # static python ints
    }


def wdqn_forward(x, packed, mask=None, *, tile_b=4096):
    """Pallas WDQNAgent.forward: returns the (B, num_action) embedding.

    `mask` is accepted but ignored for the output, matching the PyTorch module.
    tile_b is sweepable (1024-8192); 4096 amortizes per-step overhead well and
    fits every generation's scoped VMEM with large headroom.
    """
    assert tile_b % SUBLANE == 0
    d, a, hp, op, bp = packed["dims"]
    w1, w2, w3, bias = packed["w1"], packed["w2"], packed["w3"], packed["bias"]
    B = x.shape[0]
    assert x.shape[1] == d, "feature dim mismatch"

    # Choose the batch tile: big enough to amortize ~0.35us/step overhead,
    # but capped so the grid has >=2 steps (dual-TC sharding on v7x).
    if B <= SUBLANE:
        tb = B                                               # single tiny block
    else:
        tb = min(tile_b, _round_up(pl.cdiv(B, 2), SUBLANE))  # guarantees >=2 steps
    grid = (pl.cdiv(B, tb),)

    kernel = functools.partial(_mlp_kernel, hp=hp, op=op, a=a)

    out = pl.pallas_call(
        kernel,
        out_shape=jax.ShapeDtypeStruct((B, a), jnp.float32),   # slim output
        grid=grid,
        in_specs=[
            pl.BlockSpec((tb, d), lambda i: (i, 0)),     # x: streamed, native dtype/width
            pl.BlockSpec((d, hp), lambda i: (0, 0)),     # weights: VMEM-resident
            pl.BlockSpec((hp, hp), lambda i: (0, 0)),
            pl.BlockSpec((hp, op), lambda i: (0, 0)),
            pl.BlockSpec((3, bp), lambda i: (0, 0)),     # packed biases: one small DMA
        ],
        out_specs=pl.BlockSpec((tb, a), lambda i: (i, 0)),   # (tb, num_action) block
        compiler_params=pltpu.CompilerParams(
            dimension_semantics=("parallel",),           # shards batch across TCs on v7x
        ),
    )(x, w1, w2, w3, bias)

    return out


def init_params(key, num_inputs, num_hidden, num_action):
    """nn.Linear-style init U(-1/sqrt(fan_in), 1/sqrt(fan_in)), (in, out) layout."""
    def linear(k, fan_in, fan_out):
        k_w, k_b = jax.random.split(k)
        bound = 1.0 / jnp.sqrt(jnp.float32(fan_in))
        w = jax.random.uniform(k_w, (fan_in, fan_out), jnp.float32, -bound, bound)
        b = jax.random.uniform(k_b, (1, fan_out), jnp.float32, -bound, bound)
        return w, b

    k1, k2, k3 = jax.random.split(key, 3)
    w1, b1 = linear(k1, num_inputs, num_hidden)
    w2, b2 = linear(k2, num_hidden, num_hidden)
    w3, b3 = linear(k3, num_hidden, num_action)
    return {"w1": w1, "b1": b1, "w2": w2, "b2": b2, "w3": w3, "b3": b3}


if __name__ == "__main__":
    key = jax.random.PRNGKey(0)
    k_param, k_x, k_x2 = jax.random.split(key, 3)

    num_inputs = 16    # num_inputs[0] in the PyTorch module
    num_hidden = 32
    num_action = 8
    batch = 2

    params = init_params(k_param, num_inputs, num_hidden, num_action)
    x = jax.random.normal(k_x, (batch, num_inputs), jnp.float32)
    mask = jnp.ones((num_action,), jnp.float32)   # unused by forward, like PyTorch

    def ref(x, p):
        h1 = jnp.maximum(x @ p["w1"] + p["b1"], 0.0)
        h2 = jnp.maximum(h1 @ p["w2"] + p["b2"], 0.0)
        return h2 @ p["w3"] + p["b3"]

    # f32 path at the spec's small shapes: exact match (padding is inert).
    packed_f32 = pack_params(params, jnp.float32)
    emb = wdqn_forward(x, packed_f32, mask)
    jax.block_until_ready(emb)
    assert emb.shape == (batch, num_action)
    assert jnp.allclose(emb, ref(x, params), atol=1e-5, rtol=1e-5)

    # Larger batch exercises the batch grid (>=2 steps, incl. a ragged block).
    xb = jax.random.normal(k_x2, (600, num_inputs), jnp.float32)
    emb_b = wdqn_forward(xb, packed_f32, mask, tile_b=4096)
    jax.block_until_ready(emb_b)
    assert emb_b.shape == (600, num_action)
    assert jnp.allclose(emb_b, ref(xb, params), atol=1e-5, rtol=1e-5)

    # bf16 weights / in-kernel bf16 activation cast (v6e/v7x MXU datapath),
    # f32 accumulation -> relaxed tolerance.
    packed_bf16 = pack_params(params, jnp.bfloat16)
    emb_h = wdqn_forward(xb, packed_bf16, mask, tile_b=4096)
    jax.block_until_ready(emb_h)
    assert emb_h.shape == (600, num_action)
    assert jnp.allclose(emb_h, ref(xb, params), atol=1e-1, rtol=5e-2)

    # TODO(synk): act()'s epsilon-greedy sampling is host-side control flow and
    # is intentionally left outside the kernel.
    print("KERNEL_OK")
</pallas_src>

<mosaic_0001>
module attributes {stable_mosaic.version = 11 : i64} {
  func.func @_mlp_kernel(%arg0: i32, %arg1: memref<2x16xf32, #tpu.memory_space<vmem>>, %arg2: memref<16x128xf32, #tpu.memory_space<vmem>>, %arg3: memref<128x128xf32, #tpu.memory_space<vmem>>, %arg4: memref<128x128xf32, #tpu.memory_space<vmem>>, %arg5: memref<3x128xf32, #tpu.memory_space<vmem>>, %arg6: memref<2x8xf32, #tpu.memory_space<vmem>>) attributes {dimension_semantics = [#tpu.dimension_semantics<parallel>], iteration_bounds = array<i64: 1>, scalar_prefetch = 0 : i64, scratch_operands = 0 : i64, tpu.core_type = #tpu.core_type<tc>, window_params = [{transform_indices = @transform_0, window_bounds = array<i64: 2, 16>}, {pipeline_mode = #tpu.pipeline_mode<synchronous>, transform_indices = @transform_1, window_bounds = array<i64: 16, 128>}, {pipeline_mode = #tpu.pipeline_mode<synchronous>, transform_indices = @transform_2, window_bounds = array<i64: 128, 128>}, {pipeline_mode = #tpu.pipeline_mode<synchronous>, transform_indices = @transform_3, window_bounds = array<i64: 128, 128>}, {pipeline_mode = #tpu.pipeline_mode<synchronous>, transform_indices = @transform_4, window_bounds = array<i64: 3, 128>}, {transform_indices = @transform_5, window_bounds = array<i64: 2, 8>}]} {
    %c0 = arith.constant 0 : index
    %c0_0 = arith.constant 0 : index
    %0 = vector.load %arg1[%c0, %c0_0] : memref<2x16xf32, #tpu.memory_space<vmem>>, vector<2x16xf32>
    %c0_1 = arith.constant 0 : index
    %c0_2 = arith.constant 0 : index
    %1 = vector.load %arg2[%c0_1, %c0_2] : memref<16x128xf32, #tpu.memory_space<vmem>>, vector<16x128xf32>
    %cst = arith.constant dense<0.000000e+00> : vector<2x128xf32>
    %2 = tpu.matmul %0, %1, %cst {dimension_numbers = #tpu.dot_dimension_numbers<[1], [0], [0], [1], [0, 0, 1, 1], [], []>} : vector<2x16xf32>, vector<16x128xf32>, vector<2x128xf32> -> vector<2x128xf32>
    %c0_3 = arith.constant 0 : index
    %c0_4 = arith.constant 0 : index
    %3 = vector.load %arg5[%c0_3, %c0_4] : memref<3x128xf32, #tpu.memory_space<vmem>>, vector<1x128xf32>
    %4 = vector.broadcast %3 : vector<1x128xf32> to vector<2x128xf32>
    %5 = arith.addf %2, %4 : vector<2x128xf32>
    %cst_5 = arith.constant 0.000000e+00 : f32
    %6 = vector.broadcast %cst_5 : f32 to vector<2x128xf32>
    %7 = arith.maximumf %5, %6 : vector<2x128xf32>
    %c0_6 = arith.constant 0 : index
    %c0_7 = arith.constant 0 : index
    %8 = vector.load %arg3[%c0_6, %c0_7] : memref<128x128xf32, #tpu.memory_space<vmem>>, vector<128x128xf32>
    %cst_8 = arith.constant dense<0.000000e+00> : vector<2x128xf32>
    %9 = tpu.matmul %7, %8, %cst_8 {dimension_numbers = #tpu.dot_dimension_numbers<[1], [0], [0], [1], [0, 0, 1, 1], [], []>} : vector<2x128xf32>, vector<128x128xf32>, vector<2x128xf32> -> vector<2x128xf32>
    %c1 = arith.constant 1 : index
    %c0_9 = arith.constant 0 : index
    %10 = vector.load %arg5[%c1, %c0_9] : memref<3x128xf32, #tpu.memory_space<vmem>>, vector<1x128xf32>
    %11 = vector.broadcast %10 : vector<1x128xf32> to vector<2x128xf32>
    %12 = arith.addf %9, %11 : vector<2x128xf32>
    %cst_10 = arith.constant 0.000000e+00 : f32
    %13 = vector.broadcast %cst_10 : f32 to vector<2x128xf32>
    %14 = arith.maximumf %12, %13 : vector<2x128xf32>
    %c0_11 = arith.constant 0 : index
    %c0_12 = arith.constant 0 : index
    %15 = vector.load %arg4[%c0_11, %c0_12] : memref<128x128xf32, #tpu.memory_space<vmem>>, vector<128x128xf32>
    %cst_13 = arith.constant dense<0.000000e+00> : vector<2x128xf32>
    %16 = tpu.matmul %14, %15, %cst_13 {dimension_numbers = #tpu.dot_dimension_numbers<[1], [0], [0], [1], [0, 0, 1, 1], [], []>} : vector<2x128xf32>, vector<128x128xf32>, vector<2x128xf32> -> vector<2x128xf32>
    %c2 = arith.constant 2 : index
    %c0_14 = arith.constant 0 : index
    %17 = vector.load %arg5[%c2, %c0_14] : memref<3x128xf32, #tpu.memory_space<vmem>>, vector<1x128xf32>
    %18 = vector.broadcast %17 : vector<1x128xf32> to vector<2x128xf32>
    %19 = arith.addf %16, %18 : vector<2x128xf32>
    %20 = vector.extract_strided_slice %19 {offsets = [0, 0], sizes = [2, 8], strides = [1, 1]} : vector<2x128xf32> to vector<2x8xf32>
    %c0_15 = arith.constant 0 : index
    %c0_16 = arith.constant 0 : index
    %21 = vector.load %arg6[%c0_15, %c0_16] : memref<2x8xf32, #tpu.memory_space<vmem>>, vector<2x8xf32>
    tpu.vector_store %arg6[%c0_15, %c0_16], %20 {strides = array<i32>} : memref<2x8xf32, #tpu.memory_space<vmem>>, vector<2x8xf32>,
    return
  }
  func.func @transform_0(%arg0: i32) -> (i32, i32) {
    %c0_i32 = arith.constant 0 : i32
    %c0_i32_0 = arith.constant 0 : i32
    return %arg0, %c0_i32 : i32, i32
  }
  func.func @transform_1(%arg0: i32) -> (i32, i32) {
    %c0_i32 = arith.constant 0 : i32
    %c0_i32_0 = arith.constant 0 : i32
    %c0_i32_1 = arith.constant 0 : i32
    return %c0_i32, %c0_i32_0 : i32, i32
  }
  func.func @transform_2(%arg0: i32) -> (i32, i32) {
    %c0_i32 = arith.constant 0 : i32
    %c0_i32_0 = arith.constant 0 : i32
    %c0_i32_1 = arith.constant 0 : i32
    return %c0_i32, %c0_i32_0 : i32, i32
  }
  func.func @transform_3(%arg0: i32) -> (i32, i32) {
    %c0_i32 = arith.constant 0 : i32
    %c0_i32_0 = arith.constant 0 : i32
    %c0_i32_1 = arith.constant 0 : i32
    return %c0_i32, %c0_i32_0 : i32, i32
  }
  func.func @transform_4(%arg0: i32) -> (i32, i32) {
    %c0_i32 = arith.constant 0 : i32
    %c0_i32_0 = arith.constant 0 : i32
    %c0_i32_1 = arith.constant 0 : i32
    return %c0_i32, %c0_i32_0 : i32, i32
  }
  func.func @transform_5(%arg0: i32) -> (i32, i32) {
    %c0_i32 = arith.constant 0 : i32
    %c0_i32_0 = arith.constant 0 : i32
    return %arg0, %c0_i32 : i32, i32
  }
}

</mosaic_0001>

<llo_original>
// kernel: tpu_custom_call.1
$region0: #{tpu_custom_call.1}
  #allocation0 [shape = 'u32[]', space=smem, size = 0x4, offset = 0x4, fixed_abs, tag = 'smem constant byte address 0x4 - core index']
  #allocation1 [shape = 'u32[144,128]{1,0:T(1,128)}', space=vmem, size = 0x12000, scoped, tag = 'internal scratch']
  %s0 = inlined_call_operand.hbm [shape: f32[2,16], index: 0, kind: input, shape index: {}]
  %s1 = inlined_call_operand.hbm [shape: f32[16,128], index: 1, kind: input, shape index: {}]
  %s2 = inlined_call_operand.hbm [shape: f32[128,128], index: 2, kind: input, shape index: {}]
  %s3 = inlined_call_operand.hbm [shape: f32[128,128], index: 3, kind: input, shape index: {}]
  %s4 = inlined_call_operand.vmem [shape: f32[3,128], index: 4, kind: input, shape index: {}]
  %s5 = inlined_call_operand.hbm [shape: f32[2,8], index: 5, kind: output, shape index: {}]
  %s6 = sld [smem:[#allocation0]]
  $region46: #{tpu_custom_call.1} parent=0
    _
  %s8 = ssub.s32 1, %s6
  %s9 = scalar_select 0, %s8, %s6
  $region1: #{tpu_custom_call.1} parent=0
    #allocation2 [shape = 'u8[1024]{0}', space=vmem, size = 0x400, scoped, tag = 'input window, operand 0, single buffered']
    #allocation3 [shape = 's32[1]{0}', space=sflag, size = 0x4, scoped, tag = 'scoped memory for tpu_custom_call.1']
    #allocation4 [shape = 's32[1]{0}', space=sflag, size = 0x4, scoped, tag = 'scoped memory for tpu_custom_call.1']
    #allocation5 [shape = 'u8[8192]{0}', space=vmem, size = 0x2000, scoped, tag = 'input window, operand 1, single buffered']
    #allocation6 [shape = 's32[1]{0}', space=sflag, size = 0x4, scoped, tag = 'scoped memory for tpu_custom_call.1']
    #allocation7 [shape = 'u8[65536]{0}', space=vmem, size = 0x10000, scoped, tag = 'input window, operand 2, single buffered']
    #allocation8 [shape = 'u8[65536]{0}', space=vmem, size = 0x10000, scoped, tag = 'input window, operand 3, single buffered']
    #allocation9 [shape = 's32[1]{0}', space=sflag, size = 0x4, scoped, tag = 'scoped memory for tpu_custom_call.1']
    #allocation10 [shape = 'u8[1024]{0}', space=vmem, size = 0x400, scoped, tag = 'output window, operand 0, single buffered']
    %10 = vsyncpa [#allocation3], 0
    %11 = vsyncpa [#allocation6], 0
    %12 = vsyncpa [#allocation9], 0
    %13 = vsyncpa [#allocation4], 0
    // Predicated region
    $region2: #{tpu_custom_call.1} parent=1 // pred_check
      _
    $region3: #{tpu_custom_call.1} parent=1 // pred_check_branch
      %15 = sbr.rel (0) target = $region5
    $region4: #{tpu_custom_call.1} parent=1 // pred_region
      %s17 = ssub.s32 32, 32
      %18 = vsyncadd [#allocation3], %s17
      %s20 = sshll.u32 [#allocation2], 4
      %s21 = int_to_ptr.vmem [resolvable:$true] %s20
      %23 = dma.hbm_to_vmem [thread:$0]  %s0, 32, %s21, [#allocation3]
    $region5: #{tpu_custom_call.1} parent=1 // pred_fallthru
      _
    // Predicated region
    $region6: #{tpu_custom_call.1} parent=1 // pred_check
      _
    $region7: #{tpu_custom_call.1} parent=1 // pred_check_branch
      %25 = sbr.rel (0) target = $region9
    $region8: #{tpu_custom_call.1} parent=1 // pred_region
      %s27 = ssub.s32 256, 256
      %28 = vsyncadd [#allocation6], %s27
      %s29 = sshll.u32 [#allocation5], 4
      %s30 = int_to_ptr.vmem [resolvable:$true] %s29
      %35 = dma.hbm_to_vmem [thread:$0]  %s1, 256, %s30, [#allocation6], 128, 128, 8
    $region9: #{tpu_custom_call.1} parent=1 // pred_fallthru
      _
    // Predicated region
    $region10: #{tpu_custom_call.1} parent=1 // pred_check
      _
    $region11: #{tpu_custom_call.1} parent=1 // pred_check_branch
      %37 = sbr.rel (0) target = $region13
    $region12: #{tpu_custom_call.1} parent=1 // pred_region
      %s39 = ssub.s32 2048, 2048
      %40 = vsyncadd [#allocation6], %s39
      %s41 = sshll.u32 [#allocation7], 4
      %s42 = int_to_ptr.vmem [resolvable:$true] %s41
      %47 = dma.hbm_to_vmem [thread:$0]  %s2, 2048, %s42, [#allocation6], 128, 128, 8
    $region13: #{tpu_custom_call.1} parent=1 // pred_fallthru
      _
    // Predicated region
    $region14: #{tpu_custom_call.1} parent=1 // pred_check
      _
    $region15: #{tpu_custom_call.1} parent=1 // pred_check_branch
      %49 = sbr.rel (0) target = $region17
    $region16: #{tpu_custom_call.1} parent=1 // pred_region
      %s51 = ssub.s32 2048, 2048
      %52 = vsyncadd [#allocation9], %s51
      %s53 = sshll.u32 [#allocation8], 4
      %s54 = int_to_ptr.vmem [resolvable:$true] %s53
      %59 = dma.hbm_to_vmem [thread:$0]  %s3, 2048, %s54, [#allocation9], 128, 128, 8
    $region17: #{tpu_custom_call.1} parent=1 // pred_fallthru
      _
    // Predicated region
    $region18: #{tpu_custom_call.1} parent=1 // pred_check
      _
    $region19: #{tpu_custom_call.1} parent=1 // pred_check_branch
      %61 = sbr.rel (0) target = $region21
    $region20: #{tpu_custom_call.1} parent=1 // pred_region
      _
    $region21: #{tpu_custom_call.1} parent=1 // pred_fallthru
      _
    // Predicated region
    $region22: #{tpu_custom_call.1} parent=1 // pred_check
      _
    $region23: #{tpu_custom_call.1} parent=1 // pred_check_branch
      %63 = sbr.rel (0) target = $region25
    $region24: #{tpu_custom_call.1} parent=1 // pred_region
      %64 = dma.done [#allocation3], 32
    $region25: #{tpu_custom_call.1} parent=1 // pred_fallthru
      _
    // Predicated region
    $region26: #{tpu_custom_call.1} parent=1 // pred_check
      _
    $region27: #{tpu_custom_call.1} parent=1 // pred_check_branch
      %66 = sbr.rel (0) target = $region29
    $region28: #{tpu_custom_call.1} parent=1 // pred_region
      %67 = dma.done [#allocation6], 256
    $region29: #{tpu_custom_call.1} parent=1 // pred_fallthru
      _
    // Predicated region
    $region30: #{tpu_custom_call.1} parent=1 // pred_check
      _
    $region31: #{tpu_custom_call.1} parent=1 // pred_check_branch
      %69 = sbr.rel (0) target = $region33
    $region32: #{tpu_custom_call.1} parent=1 // pred_region
      %70 = dma.done [#allocation6], 2048
    $region33: #{tpu_custom_call.1} parent=1 // pred_fallthru
      _
    // Predicated region
    $region34: #{tpu_custom_call.1} parent=1 // pred_check
      _
    $region35: #{tpu_custom_call.1} parent=1 // pred_check_branch
      %72 = sbr.rel (0) target = $region37
    $region36: #{tpu_custom_call.1} parent=1 // pred_region
      %73 = dma.done [#allocation9], 2048
    $region37: #{tpu_custom_call.1} parent=1 // pred_fallthru
      _
    %v74 = vld [vmem:[#allocation2] sm:$0x3]
    %v75 = vld [vmem:[#allocation5] sm:$0xff]
    %v76 = vld [vmem:[#allocation5 + $0x8] sm:$0xff]
    %v77 = vld [vmem:[%s4] sm:$0x1]
    %v78 = vlaneseq
    %v79 = vshrl.u32 %v78, 7
    %v80 = vsub.s32 0, %v79
    %v81 = vrot.slane %v77, %v80
    %vm82 = vcmask 130048
    %v84 = vsel %vm82, %v74, 0
    %86 = vmatprep.subr.mxu0 0.0
    %87 = vmatpush1.msra.mxu0 0.0
    %88 = vmatprep.subr.mxu0 0.0
    %89 = vmatpush1.msra.mxu0 0.0
    %90 = vmatprep.subr.mxu0 0.0
    %91 = vmatpush1.msra.mxu0 0.0
    %92 = vmatprep.subr.mxu0 0.0
    %93 = vmatpush1.msra.mxu0 0.0
    %94 = vmatprep.subr.mxu0 0.0
    %95 = vmatpush1.msra.mxu0 0.0
    %96 = vmatprep.subr.mxu0 0.0
    %97 = vmatpush1.msra.mxu0 0.0
    %98 = vmatprep.subr.mxu0 0.0
    %99 = vmatpush1.msra.mxu0 0.0
    %100 = vmatprep.subr.mxu0 0.0
    %101 = vmatpush1.msra.mxu0 0.0
    %102 = vmatprep.subr.mxu0 0.0
    %103 = vmatpush1.msra.mxu0 0.0
    %104 = vmatprep.subr.mxu0 0.0
    %105 = vmatpush1.msra.mxu0 0.0
    %106 = vmatprep.subr.mxu0 0.0
    %107 = vmatpush1.msra.mxu0 0.0
    %108 = vmatprep.subr.mxu0 0.0
    %109 = vmatpush1.msra.mxu0 0.0
    %110 = vmatprep.subr.mxu0 0.0
    %111 = vmatpush1.msra.mxu0 0.0
    %112 = vmatprep.subr.mxu0 0.0
    %113 = vmatpush1.msra.mxu0 0.0
    %114 = vmatprep.subr.mxu0 0.0
    %115 = vmatpush1.msra.mxu0 %v76
    %116 = vmatprep.subr.mxu0 0.0
    %117 = vmatpush1.msra.mxu0 %v75
    %118 = vmatprep.subr.mxu0 0.0
    %119 = vmatpush2.msra.mxu0 0.0
    %120 = vmatprep.subr.mxu0 0.0
    %121 = vmatpush2.msra.mxu0 0.0
    %122 = vmatprep.subr.mxu0 0.0
    %123 = vmatpush2.msra.mxu0 0.0
    %124 = vmatprep.subr.mxu0 0.0
    %125 = vmatpush2.msra.mxu0 0.0
    %126 = vmatprep.subr.mxu0 0.0
    %127 = vmatpush2.msra.mxu0 0.0
    %128 = vmatprep.subr.mxu0 0.0
    %129 = vmatpush2.msra.mxu0 0.0
    %130 = vmatprep.subr.mxu0 0.0
    %131 = vmatpush2.msra.mxu0 0.0
    %132 = vmatprep.subr.mxu0 0.0
    %133 = vmatpush2.msra.mxu0 0.0
    %134 = vmatprep.subr.mxu0 0.0
    %135 = vmatpush2.msra.mxu0 0.0
    %136 = vmatprep.subr.mxu0 0.0
    %137 = vmatpush2.msra.mxu0 0.0
    %138 = vmatprep.subr.mxu0 0.0
    %139 = vmatpush2.msra.mxu0 0.0
    %140 = vmatprep.subr.mxu0 0.0
    %141 = vmatpush2.msra.mxu0 0.0
    %142 = vmatprep.subr.mxu0 0.0
    %143 = vmatpush2.msra.mxu0 0.0
    %144 = vmatprep.subr.mxu0 0.0
    %145 = vmatpush2.msra.mxu0 0.0
    %146 = vmatprep.subr.mxu0 0.0
    %147 = vmatpush2.msra.mxu0 0.0
    %148 = vmatprep.subr.mxu0 0.0
    %149 = vmatpush2.msra.mxu0 0.0
    %150 = vmatprep.mubr.f32.mxu0 0.0
    %151 = vmatmul.mubr.f32.gmra.mxu0 %v84
    %v152 = vpop.f32.mrf.mxu0
    %v153 = vadd.f32 %v81, %v152
    %v154 = vpop.f32.mrf.mxu0
    %155 = vdwg.mxu0
    %v156 = vmax.f32 %v153, 0.0
    %v157 = vld [vmem:[#allocation7] sm:$0xff]
    %v158 = vld [vmem:[#allocation7 + $0x8] sm:$0xff]
    %v159 = vld [vmem:[#allocation7 + $0x10] sm:$0xff]
    %v160 = vld [vmem:[#allocation7 + $0x18] sm:$0xff]
    %v161 = vld [vmem:[#allocation7 + $0x20] sm:$0xff]
    %v162 = vld [vmem:[#allocation7 + $0x28] sm:$0xff]
    %v163 = vld [vmem:[#allocation7 + $0x30] sm:$0xff]
    %v164 = vld [vmem:[#allocation7 + $0x38] sm:$0xff]
    %v165 = vld [vmem:[#allocation7 + $0x40] sm:$0xff]
    %v166 = vld [vmem:[#allocation7 + $0x48] sm:$0xff]
    %v167 = vld [vmem:[#allocation7 + $0x50] sm:$0xff]
    %v168 = vld [vmem:[#allocation7 + $0x58] sm:$0xff]
    %v169 = vld [vmem:[#allocation7 + $0x60] sm:$0xff]
    %v170 = vld [vmem:[#allocation7 + $0x68] sm:$0xff]
    %v171 = vld [vmem:[#allocation7 + $0x70] sm:$0xff]
    %v172 = vld [vmem:[#allocation7 + $0x78] sm:$0xff]
    %v173 = vld [vmem:[%s4 + $0x1] sm:$0x1]
    %v174 = vlaneseq
    %v175 = vshrl.u32 %v174, 7
    %v176 = vsub.s32 0, %v175
    %v177 = vrot.slane %v173, %v176
    %178 = vmatprep.subr.mxu0 0.0
    %179 = vmatpush1.msra.mxu0 %v172
    %180 = vmatprep.subr.mxu0 0.0
    %181 = vmatpush1.msra.mxu0 %v171
    %182 = vmatprep.subr.mxu0 0.0
    %183 = vmatpush1.msra.mxu0 %v170
    %184 = vmatprep.subr.mxu0 0.0
    %185 = vmatpush1.msra.mxu0 %v169
    %186 = vmatprep.subr.mxu0 0.0
    %187 = vmatpush1.msra.mxu0 %v168
    %188 = vmatprep.subr.mxu0 0.0
    %189 = vmatpush1.msra.mxu0 %v167
    %190 = vmatprep.subr.mxu0 0.0
    %191 = vmatpush1.msra.mxu0 %v166
    %192 = vmatprep.subr.mxu0 0.0
    %193 = vmatpush1.msra.mxu0 %v165
    %194 = vmatprep.subr.mxu0 0.0
    %195 = vmatpush1.msra.mxu0 %v164
    %196 = vmatprep.subr.mxu0 0.0
    %197 = vmatpush1.msra.mxu0 %v163
    %198 = vmatprep.subr.mxu0 0.0
    %199 = vmatpush1.msra.mxu0 %v162
    %200 = vmatprep.subr.mxu0 0.0
    %201 = vmatpush1.msra.mxu0 %v161
    %202 = vmatprep.subr.mxu0 0.0
    %203 = vmatpush1.msra.mxu0 %v160
    %204 = vmatprep.subr.mxu0 0.0
    %205 = vmatpush1.msra.mxu0 %v159
    %206 = vmatprep.subr.mxu0 0.0
    %207 = vmatpush1.msra.mxu0 %v158
    %208 = vmatprep.subr.mxu0 0.0
    %209 = vmatpush1.msra.mxu0 %v157
    %210 = vmatprep.subr.mxu0 0.0
    %211 = vmatpush2.msra.mxu0 0.0
    %212 = vmatprep.subr.mxu0 0.0
    %213 = vmatpush2.msra.mxu0 0.0
    %214 = vmatprep.subr.mxu0 0.0
    %215 = vmatpush2.msra.mxu0 0.0
    %216 = vmatprep.subr.mxu0 0.0
    %217 = vmatpush2.msra.mxu0 0.0
    %218 = vmatprep.subr.mxu0 0.0
    %219 = vmatpush2.msra.mxu0 0.0
    %220 = vmatprep.subr.mxu0 0.0
    %221 = vmatpush2.msra.mxu0 0.0
    %222 = vmatprep.subr.mxu0 0.0
    %223 = vmatpush2.msra.mxu0 0.0
    %224 = vmatprep.subr.mxu0 0.0
    %225 = vmatpush2.msra.mxu0 0.0
    %226 = vmatprep.subr.mxu0 0.0
    %227 = vmatpush2.msra.mxu0 0.0
    %228 = vmatprep.subr.mxu0 0.0
    %229 = vmatpush2.msra.mxu0 0.0
    %230 = vmatprep.subr.mxu0 0.0
    %231 = vmatpush2.msra.mxu0 0.0
    %232 = vmatprep.subr.mxu0 0.0
    %233 = vmatpush2.msra.mxu0 0.0
    %234 = vmatprep.subr.mxu0 0.0
    %235 = vmatpush2.msra.mxu0 0.0
    %236 = vmatprep.subr.mxu0 0.0
    %237 = vmatpush2.msra.mxu0 0.0
    %238 = vmatprep.subr.mxu0 0.0
    %239 = vmatpush2.msra.mxu0 0.0
    %240 = vmatprep.subr.mxu0 0.0
    %241 = vmatpush2.msra.mxu0 0.0
    %242 = vmatprep.mubr.f32.mxu0 0.0
    %243 = vmatmul.mubr.f32.gmra.mxu0 %v156
    %v244 = vpop.f32.mrf.mxu0
    %v245 = vadd.f32 %v177, %v244
    %v246 = vpop.f32.mrf.mxu0
    %247 = vdwg.mxu0
    %v248 = vmax.f32 %v245, 0.0
    %v249 = vld [vmem:[#allocation8] sm:$0xff]
    %v250 = vld [vmem:[#allocation8 + $0x8] sm:$0xff]
    %v251 = vld [vmem:[#allocation8 + $0x10] sm:$0xff]
    %v252 = vld [vmem:[#allocation8 + $0x18] sm:$0xff]
    %v253 = vld [vmem:[#allocation8 + $0x20] sm:$0xff]
    %v254 = vld [vmem:[#allocation8 + $0x28] sm:$0xff]
    %v255 = vld [vmem:[#allocation8 + $0x30] sm:$0xff]
    %v256 = vld [vmem:[#allocation8 + $0x38] sm:$0xff]
    %v257 = vld [vmem:[#allocation8 + $0x40] sm:$0xff]
    %v258 = vld [vmem:[#allocation8 + $0x48] sm:$0xff]
    %v259 = vld [vmem:[#allocation8 + $0x50] sm:$0xff]
    %v260 = vld [vmem:[#allocation8 + $0x58] sm:$0xff]
    %v261 = vld [vmem:[#allocation8 + $0x60] sm:$0xff]
    %v262 = vld [vmem:[#allocation8 + $0x68] sm:$0xff]
    %v263 = vld [vmem:[#allocation8 + $0x70] sm:$0xff]
    %v264 = vld [vmem:[#allocation8 + $0x78] sm:$0xff]
    %v265 = vld [vmem:[%s4 + $0x2] sm:$0x1]
    %v266 = vlaneseq
    %v267 = vshrl.u32 %v266, 7
    %v268 = vsub.s32 0, %v267
    %v269 = vrot.slane %v265, %v268
    %270 = vmatprep.subr.mxu0 0.0
    %271 = vmatpush1.msra.mxu0 %v264
    %272 = vmatprep.subr.mxu0 0.0
    %273 = vmatpush1.msra.mxu0 %v263
    %274 = vmatprep.subr.mxu0 0.0
    %275 = vmatpush1.msra.mxu0 %v262
    %276 = vmatprep.subr.mxu0 0.0
    %277 = vmatpush1.msra.mxu0 %v261
    %278 = vmatprep.subr.mxu0 0.0
    %279 = vmatpush1.msra.mxu0 %v260
    %280 = vmatprep.subr.mxu0 0.0
    %281 = vmatpush1.msra.mxu0 %v259
    %282 = vmatprep.subr.mxu0 0.0
    %283 = vmatpush1.msra.mxu0 %v258
    %284 = vmatprep.subr.mxu0 0.0
    %285 = vmatpush1.msra.mxu0 %v257
    %286 = vmatprep.subr.mxu0 0.0
    %287 = vmatpush1.msra.mxu0 %v256
    %288 = vmatprep.subr.mxu0 0.0
    %289 = vmatpush1.msra.mxu0 %v255
    %290 = vmatprep.subr.mxu0 0.0
    %291 = vmatpush1.msra.mxu0 %v254
    %292 = vmatprep.subr.mxu0 0.0
    %293 = vmatpush1.msra.mxu0 %v253
    %294 = vmatprep.subr.mxu0 0.0
    %295 = vmatpush1.msra.mxu0 %v252
    %296 = vmatprep.subr.mxu0 0.0
    %297 = vmatpush1.msra.mxu0 %v251
    %298 = vmatprep.subr.mxu0 0.0
    %299 = vmatpush1.msra.mxu0 %v250
    %300 = vmatprep.subr.mxu0 0.0
    %301 = vmatpush1.msra.mxu0 %v249
    %302 = vmatprep.subr.mxu0 0.0
    %303 = vmatpush2.msra.mxu0 0.0
    %304 = vmatprep.subr.mxu0 0.0
    %305 = vmatpush2.msra.mxu0 0.0
    %306 = vmatprep.subr.mxu0 0.0
    %307 = vmatpush2.msra.mxu0 0.0
    %308 = vmatprep.subr.mxu0 0.0
    %309 = vmatpush2.msra.mxu0 0.0
    %310 = vmatprep.subr.mxu0 0.0
    %311 = vmatpush2.msra.mxu0 0.0
    %312 = vmatprep.subr.mxu0 0.0
    %313 = vmatpush2.msra.mxu0 0.0
    %314 = vmatprep.subr.mxu0 0.0
    %315 = vmatpush2.msra.mxu0 0.0
    %316 = vmatprep.subr.mxu0 0.0
    %317 = vmatpush2.msra.mxu0 0.0
    %318 = vmatprep.subr.mxu0 0.0
    %319 = vmatpush2.msra.mxu0 0.0
    %320 = vmatprep.subr.mxu0 0.0
    %321 = vmatpush2.msra.mxu0 0.0
    %322 = vmatprep.subr.mxu0 0.0
    %323 = vmatpush2.msra.mxu0 0.0
    %324 = vmatprep.subr.mxu0 0.0
    %325 = vmatpush2.msra.mxu0 0.0
    %326 = vmatprep.subr.mxu0 0.0
    %327 = vmatpush2.msra.mxu0 0.0
    %328 = vmatprep.subr.mxu0 0.0
    %329 = vmatpush2.msra.mxu0 0.0
    %330 = vmatprep.subr.mxu0 0.0
    %331 = vmatpush2.msra.mxu0 0.0
    %332 = vmatprep.subr.mxu0 0.0
    %333 = vmatpush2.msra.mxu0 0.0
    %334 = vmatprep.mubr.f32.mxu0 0.0
    %335 = vmatmul.mubr.f32.gmra.mxu0 %v248
    %v336 = vpop.f32.mrf.mxu0
    %v337 = vadd.f32 %v269, %v336
    %v338 = vpop.f32.mrf.mxu0
    %339 = vdwg.mxu0
    %vm340 = vcmask 58368
    %341 = vst.msk [vmem:[#allocation10] sm:$0x3] %vm340, %v337
    // Predicated region
    $region38: #{tpu_custom_call.1} parent=1 // pred_check
      _
    $region39: #{tpu_custom_call.1} parent=1 // pred_check_branch
      %343 = sbr.rel (0) target = $region41
    $region40: #{tpu_custom_call.1} parent=1 // pred_region
      %s345 = ssub.s32 32, 32
      %346 = vsyncadd [#allocation4], %s345
      %s348 = sshll.u32 [#allocation10], 4
      %s349 = int_to_ptr.vmem [resolvable:$true] %s348
      %351 = dma.vmem_to_hbm [thread:$0]  %s349, 32, %s5, [#allocation4]
    $region41: #{tpu_custom_call.1} parent=1 // pred_fallthru
      _
    // Predicated region
    $region42: #{tpu_custom_call.1} parent=1 // pred_check
      _
    $region43: #{tpu_custom_call.1} parent=1 // pred_check_branch
      %353 = sbr.rel (0) target = $region45
    $region44: #{tpu_custom_call.1} parent=1 // pred_region
      %354 = dma.done [#allocation4], 32
    $region45: #{tpu_custom_call.1} parent=1 // pred_fallthru
      _
    %355 = vsyncpa [#allocation3], 1
    %356 = vsyncpa [#allocation6], 1
    %357 = vsyncpa [#allocation9], 1
    %358 = vsyncpa [#allocation4], 1

</llo_original>
